<compile_context>
chip_gen: v5e
topology: v5e:2x2
jax: 0.10.0
libtpu: 0.0.40
codegen_flags: <defaults>
</compile_context>

<pallas_src>
import functools

import jax
import jax.numpy as jnp
from jax.experimental import pallas as pl
from jax.experimental.pallas import tpu as pltpu


# --------------------------------------------------------------------------
# Fast path: one fused kernel, whole-image slabs.
# --------------------------------------------------------------------------
def _ca_fused_kernel(x_ref, w1t_ref, b1_ref, w2_ref, b2_ref, o_ref):
    # x_ref : (Bt, C, HW)   w1t_ref: (C, HID)   b1_ref: (1, HID)
    # w2_ref: (C, HID)      b2_ref : (C, 1)     o_ref : (Bt, C, HW)
    x = x_ref[...]                                            # native dtype

    # Global average pool over spatial dims (lane reduce), accumulate in f32.
    pooled = jnp.mean(x.astype(jnp.float32), axis=-1, keepdims=True)   # (Bt, C, 1)

    # fc1 + ReLU: broadcast-mul + sublane reduce; h is a lane vector (HID).
    w1t = w1t_ref[...].astype(jnp.float32)                    # (C, HID)
    h = jnp.sum(w1t * pooled, axis=1) + b1_ref[...].astype(jnp.float32)  # (Bt, HID)
    h = jnp.maximum(h, 0.0)

    # fc2 + sigmoid: broadcast-mul + lane reduce; s lands as (Bt, C, 1).
    w2 = w2_ref[...].astype(jnp.float32)                      # (C, HID)
    s = jnp.sum(w2[None, :, :] * h[:, None, :], axis=-1, keepdims=True)  # (Bt, C, 1)
    s = jax.nn.sigmoid(s + b2_ref[...].astype(jnp.float32))

    # Channel-wise scale; the dominant elementwise pass stays in x's dtype.
    o_ref[...] = (x * s.astype(x.dtype)).astype(o_ref.dtype)


# --------------------------------------------------------------------------
# Tiled path, pass 1: spatial-sum accumulation + fused tiny FC -> scale.
# --------------------------------------------------------------------------
def _ca_pool_fc_kernel(x_ref, w1t_ref, b1_ref, w2_ref, b2_ref, s_ref, acc_ref,
                       *, hw, hwt):
    # x_ref: (1, C, hwt)  s_ref: (1, C, 1) f32  acc_ref: VMEM (1, C, 1) f32
    j = pl.program_id(1)

    @pl.when(j == 0)
    def _():
        acc_ref[...] = jnp.zeros_like(acc_ref)

    x = x_ref[...]
    if hw % hwt != 0:
        # Mask the padded tail of the last spatial tile (tiny lane-only mask).
        lane = jax.lax.broadcasted_iota(jnp.int32, (1, 1, hwt), 2)
        x = jnp.where(lane < (hw - j * hwt), x, jnp.zeros((), x.dtype))
    acc_ref[...] += jnp.sum(x.astype(jnp.float32), axis=-1, keepdims=True)

    @pl.when(j == pl.num_programs(1) - 1)
    def _():
        pooled = acc_ref[...] * (1.0 / hw)                        # (1, C, 1)
        w1t = w1t_ref[...].astype(jnp.float32)                    # (C, HID)
        h = jnp.sum(w1t * pooled, axis=1) + b1_ref[...].astype(jnp.float32)
        h = jnp.maximum(h, 0.0)                                   # (1, HID)
        w2 = w2_ref[...].astype(jnp.float32)                      # (C, HID)
        s = jnp.sum(w2[None, :, :] * h[:, None, :], axis=-1, keepdims=True)
        s_ref[...] = jax.nn.sigmoid(s + b2_ref[...].astype(jnp.float32))


# --------------------------------------------------------------------------
# Tiled path, pass 2: broadcast the per-channel scale over spatial tiles.
# --------------------------------------------------------------------------
def _ca_scale_kernel(s_ref, x_ref, o_ref):
    # s_ref: (1, C, 1) f32   x_ref / o_ref: (1, C, hwt)
    x = x_ref[...]
    o_ref[...] = (x * s_ref[...].astype(x.dtype)).astype(o_ref.dtype)


# --------------------------------------------------------------------------
# Wrapper
# --------------------------------------------------------------------------
def channel_attention(x, w1, b1, w2, b2, *,
                      target_block_bytes=4 << 20,
                      max_fast_slab_bytes=6 << 20):
    """x: (B, C, H, W) NCHW; w1: (C//16, C); b1: (C//16,); w2: (C, C//16); b2: (C,)."""
    B, C, H, W = x.shape
    HID = w1.shape[0]
    HW = H * W
    itemsize = x.dtype.itemsize
    x2 = x.reshape(B, C, HW)

    # Weight layouts chosen so the in-kernel math is layout-natural
    # (no sublane<->lane moves of pooled / h).
    w1_t = jnp.transpose(w1)          # (C, HID): C on sublanes, HID on lanes
    b1_2d = b1.reshape(1, HID)        # lane vector
    b2_2d = b2.reshape(C, 1)          # sublane vector

    per_image_bytes = C * HW * itemsize

    if per_image_bytes <= max_fast_slab_bytes:
        # ---------------- fast single-pass path ----------------
        bt = max(1, min(B, target_block_bytes // max(1, per_image_bytes)))
        while B % bt != 0:
            bt -= 1
        block_bytes = bt * per_image_bytes
        # in (2x) + out (2x) double-buffered + f32 pooling temp + headroom,
        # capped well below v7x's 64 MiB physical VMEM.
        vmem_limit = int(min(max(6 * block_bytes + (2 << 20), 32 << 20), 48 << 20))

        cost = pl.CostEstimate(
            flops=2 * B * C * HW + 4 * B * C * HID,
            transcendentals=B * C,
            bytes_accessed=2 * B * C * HW * itemsize + 2 * C * HID * 4 + (HID + C) * 4,
        )
        out = pl.pallas_call(
            _ca_fused_kernel,
            out_shape=jax.ShapeDtypeStruct((B, C, HW), x.dtype),
            grid=(B // bt,),
            in_specs=[
                pl.BlockSpec((bt, C, HW), lambda b: (b, 0, 0)),
                pl.BlockSpec((C, HID), lambda b: (0, 0)),
                pl.BlockSpec((1, HID), lambda b: (0, 0)),
                pl.BlockSpec((C, HID), lambda b: (0, 0)),
                pl.BlockSpec((C, 1), lambda b: (0, 0)),
            ],
            out_specs=pl.BlockSpec((bt, C, HW), lambda b: (b, 0, 0)),
            compiler_params=pltpu.CompilerParams(
                dimension_semantics=("parallel",),
                vmem_limit_bytes=vmem_limit,
            ),
            cost_estimate=cost,
        )(x2, w1_t, b1_2d, w2, b2_2d)
        return out.reshape(B, C, H, W)

    # ---------------- tiled two-pass path (large spatial) ----------------
    # Spatial tile: multiple of 128 lanes for dense, unmasked stores.
    hwt = max(128, (target_block_bytes // max(1, C * itemsize)) // 128 * 128)
    hwt = min(hwt, HW)
    n_hw = pl.cdiv(HW, hwt)
    block_bytes = C * hwt * itemsize
    vmem_limit = int(min(max(6 * block_bytes + (2 << 20), 32 << 20), 48 << 20))

    # Pass 1: pooled mean + tiny FC -> per-channel sigmoid scale (B, C, 1).
    pool_cost = pl.CostEstimate(
        flops=B * C * HW + 4 * B * C * HID,
        transcendentals=B * C,
        bytes_accessed=B * C * HW * itemsize + B * C * 4,
    )
    s = pl.pallas_call(
        functools.partial(_ca_pool_fc_kernel, hw=HW, hwt=hwt),
        out_shape=jax.ShapeDtypeStruct((B, C, 1), jnp.float32),
        grid=(B, n_hw),
        in_specs=[
            pl.BlockSpec((1, C, hwt), lambda b, j: (b, 0, j)),
            pl.BlockSpec((C, HID), lambda b, j: (0, 0)),
            pl.BlockSpec((1, HID), lambda b, j: (0, 0)),
            pl.BlockSpec((C, HID), lambda b, j: (0, 0)),
            pl.BlockSpec((C, 1), lambda b, j: (0, 0)),
        ],
        out_specs=pl.BlockSpec((1, C, 1), lambda b, j: (b, 0, 0)),
        scratch_shapes=[pltpu.VMEM((1, C, 1), jnp.float32)],
        compiler_params=pltpu.CompilerParams(
            dimension_semantics=("parallel", "arbitrary"),
            vmem_limit_bytes=vmem_limit,
        ),
        cost_estimate=pool_cost,
    )(x2, w1_t, b1_2d, w2, b2_2d)

    # Pass 2: apply the scale tile-by-tile (x read again; unavoidable once a
    # single image no longer fits in VMEM).
    scale_cost = pl.CostEstimate(
        flops=B * C * HW,
        transcendentals=0,
        bytes_accessed=2 * B * C * HW * itemsize + B * C * 4,
    )
    out = pl.pallas_call(
        _ca_scale_kernel,
        out_shape=jax.ShapeDtypeStruct((B, C, HW), x.dtype),
        grid=(B, n_hw),
        in_specs=[
            pl.BlockSpec((1, C, 1), lambda b, j: (b, 0, 0)),
            pl.BlockSpec((1, C, hwt), lambda b, j: (b, 0, j)),
        ],
        out_specs=pl.BlockSpec((1, C, hwt), lambda b, j: (b, 0, j)),
        compiler_params=pltpu.CompilerParams(
            dimension_semantics=("parallel", "parallel"),
            vmem_limit_bytes=vmem_limit,
        ),
        cost_estimate=scale_cost,
    )(s, x2)
    return out.reshape(B, C, H, W)


def reference(x, w1, b1, w2, b2):
    """Pure-JAX reference matching the PyTorch forward."""
    pooled = jnp.mean(x, axis=(2, 3))                     # (B, C)
    h = jax.nn.relu(pooled @ w1.T + b1)                   # (B, C//16)
    s = jax.nn.sigmoid(h @ w2.T + b2)                     # (B, C)
    return x * s[:, :, None, None]


if __name__ == "__main__":
    # Small shapes consistent with the module (channels must be >= 16).
    B, C, H, W = 2, 32, 16, 16
    HID = C // 16

    key = jax.random.PRNGKey(0)
    kx, k1, k2, k3, k4 = jax.random.split(key, 5)

    x = jax.random.normal(kx, (B, C, H, W), dtype=jnp.float32)

    # Deterministic parameter init (PyTorch Linear-style uniform bounds).
    bound1 = 1.0 / (C ** 0.5)
    w1 = jax.random.uniform(k1, (HID, C), jnp.float32, -bound1, bound1)
    b1 = jax.random.uniform(k2, (HID,), jnp.float32, -bound1, bound1)
    bound2 = 1.0 / (HID ** 0.5)
    w2 = jax.random.uniform(k3, (C, HID), jnp.float32, -bound2, bound2)
    b2 = jax.random.uniform(k4, (C,), jnp.float32, -bound2, bound2)

    ref = reference(x, w1, b1, w2, b2)

    # 1) Fast single-pass path (default selection at this size).
    out_fast = jax.block_until_ready(channel_attention(x, w1, b1, w2, b2))
    assert out_fast.shape == (B, C, H, W)
    assert jnp.allclose(out_fast, ref, atol=1e-5, rtol=1e-5), "fast path mismatch"

    # 2) Force the spatially tiled two-pass path (exercises accumulation).
    out_tiled = jax.block_until_ready(
        channel_attention(x, w1, b1, w2, b2,
                          max_fast_slab_bytes=0, target_block_bytes=16 << 10))
    assert jnp.allclose(out_tiled, ref, atol=1e-5, rtol=1e-5), "tiled path mismatch"

    # 3) Tiled path with a non-divisible spatial extent (masked partial tile).
    x_odd = jax.random.normal(kx, (B, C, 18, 18), dtype=jnp.float32)
    ref_odd = reference(x_odd, w1, b1, w2, b2)
    out_odd = jax.block_until_ready(
        channel_attention(x_odd, w1, b1, w2, b2,
                          max_fast_slab_bytes=0, target_block_bytes=16 << 10))
    assert jnp.allclose(out_odd, ref_odd, atol=1e-5, rtol=1e-5), "masked tile mismatch"

    print("KERNEL_OK")
</pallas_src>

<mosaic_0001>
module attributes {stable_mosaic.version = 11 : i64} {
  func.func @_ca_fused_kernel(%arg0: i32, %arg1: memref<2x32x256xf32, #tpu.memory_space<vmem>>, %arg2: memref<32x2xf32, #tpu.memory_space<vmem>>, %arg3: memref<1x2xf32, #tpu.memory_space<vmem>>, %arg4: memref<32x2xf32, #tpu.memory_space<vmem>>, %arg5: memref<32x1xf32, #tpu.memory_space<vmem>>, %arg6: memref<2x32x256xf32, #tpu.memory_space<vmem>>) attributes {dimension_semantics = [#tpu.dimension_semantics<parallel>], iteration_bounds = array<i64: 1>, scalar_prefetch = 0 : i64, scratch_operands = 0 : i64, tpu.core_type = #tpu.core_type<tc>, window_params = [{transform_indices = @transform_0, window_bounds = array<i64: 2, 32, 256>}, {pipeline_mode = #tpu.pipeline_mode<synchronous>, transform_indices = @transform_1, window_bounds = array<i64: 32, 2>}, {pipeline_mode = #tpu.pipeline_mode<synchronous>, transform_indices = @transform_2, window_bounds = array<i64: 1, 2>}, {pipeline_mode = #tpu.pipeline_mode<synchronous>, transform_indices = @transform_3, window_bounds = array<i64: 32, 2>}, {pipeline_mode = #tpu.pipeline_mode<synchronous>, transform_indices = @transform_4, window_bounds = array<i64: 32, 1>}, {transform_indices = @transform_5, window_bounds = array<i64: 2, 32, 256>}]} {
    %c0 = arith.constant 0 : index
    %c0_0 = arith.constant 0 : index
    %c0_1 = arith.constant 0 : index
    %0 = vector.load %arg1[%c0, %c0_0, %c0_1] : memref<2x32x256xf32, #tpu.memory_space<vmem>>, vector<2x32x256xf32>
    %cst = arith.constant dense<0.000000e+00> : vector<2x32xf32>
    %1 = vector.multi_reduction <add>, %0, %cst [2] : vector<2x32x256xf32> to vector<2x32xf32>
    %2 = vector.shape_cast %1 : vector<2x32xf32> to vector<2x32x1xf32>
    %cst_2 = arith.constant 2.560000e+02 : f32
    %3 = vector.broadcast %cst_2 : f32 to vector<2x32x1xf32>
    %4 = arith.divf %2, %3 : vector<2x32x1xf32>
    %c0_3 = arith.constant 0 : index
    %c0_4 = arith.constant 0 : index
    %5 = vector.load %arg2[%c0_3, %c0_4] : memref<32x2xf32, #tpu.memory_space<vmem>>, vector<32x2xf32>
    %6 = vector.shape_cast %5 : vector<32x2xf32> to vector<1x32x2xf32>
    %7 = vector.broadcast %6 : vector<1x32x2xf32> to vector<2x32x2xf32>
    %8 = vector.broadcast %4 : vector<2x32x1xf32> to vector<2x32x2xf32>
    %9 = arith.mulf %7, %8 : vector<2x32x2xf32>
    %cst_5 = arith.constant dense<0.000000e+00> : vector<2x2xf32>
    %10 = vector.multi_reduction <add>, %9, %cst_5 [1] : vector<2x32x2xf32> to vector<2x2xf32>
    %c0_6 = arith.constant 0 : index
    %c0_7 = arith.constant 0 : index
    %11 = vector.load %arg3[%c0_6, %c0_7] : memref<1x2xf32, #tpu.memory_space<vmem>>, vector<1x2xf32>
    %12 = vector.broadcast %11 : vector<1x2xf32> to vector<2x2xf32>
    %13 = arith.addf %10, %12 : vector<2x2xf32>
    %cst_8 = arith.constant 0.000000e+00 : f32
    %14 = vector.broadcast %cst_8 : f32 to vector<2x2xf32>
    %15 = arith.maximumf %13, %14 : vector<2x2xf32>
    %c0_9 = arith.constant 0 : index
    %c0_10 = arith.constant 0 : index
    %16 = vector.load %arg4[%c0_9, %c0_10] : memref<32x2xf32, #tpu.memory_space<vmem>>, vector<32x2xf32>
    %17 = vector.shape_cast %16 : vector<32x2xf32> to vector<1x32x2xf32>
    %18 = vector.shape_cast %15 : vector<2x2xf32> to vector<2x1x2xf32>
    %19 = vector.broadcast %17 : vector<1x32x2xf32> to vector<2x32x2xf32>
    %20 = vector.broadcast %18 : vector<2x1x2xf32> to vector<2x32x2xf32>
    %21 = arith.mulf %19, %20 : vector<2x32x2xf32>
    %cst_11 = arith.constant dense<0.000000e+00> : vector<2x32xf32>
    %22 = vector.multi_reduction <add>, %21, %cst_11 [2] : vector<2x32x2xf32> to vector<2x32xf32>
    %23 = vector.shape_cast %22 : vector<2x32xf32> to vector<2x32x1xf32>
    %c0_12 = arith.constant 0 : index
    %c0_13 = arith.constant 0 : index
    %24 = vector.load %arg5[%c0_12, %c0_13] : memref<32x1xf32, #tpu.memory_space<vmem>>, vector<32x1xf32>
    %25 = vector.shape_cast %24 : vector<32x1xf32> to vector<1x32x1xf32>
    %26 = vector.broadcast %25 : vector<1x32x1xf32> to vector<2x32x1xf32>
    %27 = arith.addf %23, %26 : vector<2x32x1xf32>
    %28 = arith.negf %27 : vector<2x32x1xf32>
    %29 = math.exp %28 : vector<2x32x1xf32>
    %cst_14 = arith.constant 1.000000e+00 : f32
    %30 = vector.broadcast %cst_14 : f32 to vector<2x32x1xf32>
    %31 = arith.addf %30, %29 : vector<2x32x1xf32>
    %32 = arith.divf %30, %31 : vector<2x32x1xf32>
    %33 = vector.broadcast %32 : vector<2x32x1xf32> to vector<2x32x256xf32>
    %34 = arith.mulf %0, %33 : vector<2x32x256xf32>
    %c0_15 = arith.constant 0 : index
    %c0_16 = arith.constant 0 : index
    %c0_17 = arith.constant 0 : index
    %35 = vector.load %arg6[%c0_15, %c0_16, %c0_17] : memref<2x32x256xf32, #tpu.memory_space<vmem>>, vector<2x32x256xf32>
    tpu.vector_store %arg6[%c0_15, %c0_16, %c0_17], %34 {strides = array<i32>} : memref<2x32x256xf32, #tpu.memory_space<vmem>>, vector<2x32x256xf32>,
    return
  }
  func.func @transform_0(%arg0: i32) -> (i32, i32, i32) {
    %c0_i32 = arith.constant 0 : i32
    %c0_i32_0 = arith.constant 0 : i32
    %c0_i32_1 = arith.constant 0 : i32
    return %arg0, %c0_i32, %c0_i32_0 : i32, i32, i32
  }
  func.func @transform_1(%arg0: i32) -> (i32, i32) {
    %c0_i32 = arith.constant 0 : i32
    %c0_i32_0 = arith.constant 0 : i32
    %c0_i32_1 = arith.constant 0 : i32
    return %c0_i32, %c0_i32_0 : i32, i32
  }
  func.func @transform_2(%arg0: i32) -> (i32, i32) {
    %c0_i32 = arith.constant 0 : i32
    %c0_i32_0 = arith.constant 0 : i32
    %c0_i32_1 = arith.constant 0 : i32
    return %c0_i32, %c0_i32_0 : i32, i32
  }
  func.func @transform_3(%arg0: i32) -> (i32, i32) {
    %c0_i32 = arith.constant 0 : i32
    %c0_i32_0 = arith.constant 0 : i32
    %c0_i32_1 = arith.constant 0 : i32
    return %c0_i32, %c0_i32_0 : i32, i32
  }
  func.func @transform_4(%arg0: i32) -> (i32, i32) {
    %c0_i32 = arith.constant 0 : i32
    %c0_i32_0 = arith.constant 0 : i32
    %c0_i32_1 = arith.constant 0 : i32
    return %c0_i32, %c0_i32_0 : i32, i32
  }
  func.func @transform_5(%arg0: i32) -> (i32, i32, i32) {
    %c0_i32 = arith.constant 0 : i32
    %c0_i32_0 = arith.constant 0 : i32
    %c0_i32_1 = arith.constant 0 : i32
    return %arg0, %c0_i32, %c0_i32_0 : i32, i32, i32
  }
}

</mosaic_0001>

<llo_original>
// kernel: tpu_custom_call.1
$region0: #{tpu_custom_call.1}
  #allocation0 [shape = 'u32[]', space=smem, size = 0x4, offset = 0x4, fixed_abs, tag = 'smem constant byte address 0x4 - core index']
  #allocation1 [shape = 'u32[72,128]{1,0:T(1,128)}', space=vmem, size = 0x9000, scoped, tag = 'internal scratch']
  %s0 = inlined_call_operand.hbm [shape: f32[2,32,256], index: 0, kind: input, shape index: {}]
  %s1 = inlined_call_operand.vmem [shape: f32[32,2], index: 1, kind: input, shape index: {}]
  %s2 = inlined_call_operand.vmem [shape: f32[1,2], index: 2, kind: input, shape index: {}]
  %s3 = inlined_call_operand.vmem [shape: f32[32,2], index: 3, kind: input, shape index: {}]
  %s4 = inlined_call_operand.vmem [shape: f32[32,1], index: 4, kind: input, shape index: {}]
  %s5 = inlined_call_operand.hbm [shape: f32[2,32,256], index: 5, kind: output, shape index: {}]
  %s6 = sld [smem:[#allocation0]]
  $region34: #{tpu_custom_call.1} parent=0
    _
  %s8 = ssub.s32 1, %s6
  %s9 = scalar_select 0, %s8, %s6
  $region1: #{tpu_custom_call.1} parent=0
    #allocation2 [shape = 'u8[65536]{0}', space=vmem, size = 0x10000, scoped, tag = 'input window, operand 0, single buffered']
    #allocation3 [shape = 's32[1]{0}', space=sflag, size = 0x4, scoped, tag = 'scoped memory for tpu_custom_call.1']
    #allocation4 [shape = 's32[1]{0}', space=sflag, size = 0x4, scoped, tag = 'scoped memory for tpu_custom_call.1']
    #allocation5 [shape = 'u8[65536]{0}', space=vmem, size = 0x10000, scoped, tag = 'output window, operand 0, single buffered']
    %10 = vsyncpa [#allocation3], 0
    %11 = vsyncpa [#allocation4], 0
    // Predicated region
    $region2: #{tpu_custom_call.1} parent=1 // pred_check
      _
    $region3: #{tpu_custom_call.1} parent=1 // pred_check_branch
      %13 = sbr.rel (0) target = $region5
    $region4: #{tpu_custom_call.1} parent=1 // pred_region
      %15 = vsyncadd [#allocation3], 0
      %s16 = sshll.u32 %s0, 4
      %s17 = int_to_ptr.hbm [resolvable:$true] %s16
      %s18 = sshll.u32 [#allocation2], 4
      %s19 = int_to_ptr.vmem [resolvable:$true] %s18
      %24 = dma.hbm_to_vmem [thread:$0]  %s17, 2048, %s19, [#allocation3], 256, 256, 16
    $region5: #{tpu_custom_call.1} parent=1 // pred_fallthru
      _
    // Predicated region
    $region6: #{tpu_custom_call.1} parent=1 // pred_check
      _
    $region7: #{tpu_custom_call.1} parent=1 // pred_check_branch
      %26 = sbr.rel (0) target = $region9
    $region8: #{tpu_custom_call.1} parent=1 // pred_region
      _
    $region9: #{tpu_custom_call.1} parent=1 // pred_fallthru
      _
    // Predicated region
    $region10: #{tpu_custom_call.1} parent=1 // pred_check
      _
    $region11: #{tpu_custom_call.1} parent=1 // pred_check_branch
      %28 = sbr.rel (0) target = $region13
    $region12: #{tpu_custom_call.1} parent=1 // pred_region
      _
    $region13: #{tpu_custom_call.1} parent=1 // pred_fallthru
      _
    // Predicated region
    $region14: #{tpu_custom_call.1} parent=1 // pred_check
      _
    $region15: #{tpu_custom_call.1} parent=1 // pred_check_branch
      %30 = sbr.rel (0) target = $region17
    $region16: #{tpu_custom_call.1} parent=1 // pred_region
      _
    $region17: #{tpu_custom_call.1} parent=1 // pred_fallthru
      _
    // Predicated region
    $region18: #{tpu_custom_call.1} parent=1 // pred_check
      _
    $region19: #{tpu_custom_call.1} parent=1 // pred_check_branch
      %32 = sbr.rel (0) target = $region21
    $region20: #{tpu_custom_call.1} parent=1 // pred_region
      _
    $region21: #{tpu_custom_call.1} parent=1 // pred_fallthru
      _
    // Predicated region
    $region22: #{tpu_custom_call.1} parent=1 // pred_check
      _
    $region23: #{tpu_custom_call.1} parent=1 // pred_check_branch
      %34 = sbr.rel (0) target = $region25
    $region24: #{tpu_custom_call.1} parent=1 // pred_region
      %36 = dma.done [#allocation3], 2048
    $region25: #{tpu_custom_call.1} parent=1 // pred_fallthru
      _
    %v37 = vld [vmem:[#allocation2] sm:$0xff]
    %v38 = vld [vmem:[#allocation2 + $0x8] sm:$0xff]
    %v39 = vld [vmem:[#allocation2 + $0x10] sm:$0xff]
    %v40 = vld [vmem:[#allocation2 + $0x18] sm:$0xff]
    %v41 = vld [vmem:[#allocation2 + $0x20] sm:$0xff]
    %v42 = vld [vmem:[#allocation2 + $0x28] sm:$0xff]
    %v43 = vld [vmem:[#allocation2 + $0x30] sm:$0xff]
    %v44 = vld [vmem:[#allocation2 + $0x38] sm:$0xff]
    %v45 = vld [vmem:[#allocation2 + $0x40] sm:$0xff]
    %v46 = vld [vmem:[#allocation2 + $0x48] sm:$0xff]
    %v47 = vld [vmem:[#allocation2 + $0x50] sm:$0xff]
    %v48 = vld [vmem:[#allocation2 + $0x58] sm:$0xff]
    %v49 = vld [vmem:[#allocation2 + $0x60] sm:$0xff]
    %v50 = vld [vmem:[#allocation2 + $0x68] sm:$0xff]
    %v51 = vld [vmem:[#allocation2 + $0x70] sm:$0xff]
    %v52 = vld [vmem:[#allocation2 + $0x78] sm:$0xff]
    %v53 = vadd.f32 %v37, %v38
    %54 = vadd.xlane.f32.xlu0 %v53
    %v55 = vpop.xlane.xlu0 %54
    %v56 = vadd.f32 %v39, %v40
    %57 = vadd.xlane.f32.xlu0 %v56
    %v58 = vpop.xlane.xlu0 %57
    %v59 = vadd.f32 %v41, %v42
    %60 = vadd.xlane.f32.xlu0 %v59
    %v61 = vpop.xlane.xlu0 %60
    %v62 = vadd.f32 %v43, %v44
    %63 = vadd.xlane.f32.xlu0 %v62
    %v64 = vpop.xlane.xlu0 %63
    %v65 = vadd.f32 %v45, %v46
    %66 = vadd.xlane.f32.xlu0 %v65
    %v67 = vpop.xlane.xlu0 %66
    %v68 = vadd.f32 %v47, %v48
    %69 = vadd.xlane.f32.xlu0 %v68
    %v70 = vpop.xlane.xlu0 %69
    %v71 = vadd.f32 %v49, %v50
    %72 = vadd.xlane.f32.xlu0 %v71
    %v73 = vpop.xlane.xlu0 %72
    %v74 = vadd.f32 %v51, %v52
    %75 = vadd.xlane.f32.xlu0 %v74
    %v76 = vpop.xlane.xlu0 %75
    %v77 = vrcp.pop 256.0
    %v78 = vmul.f32 256.0, %v77
    %v79 = vsub.f32 1.0, %v78
    %v80 = vmul.f32 %v77, %v79
    %v81 = vadd.f32 %v77, %v80
    %vm82 = vweird.f32 %v77
    %v83 = vsel %vm82, %v77, %v81
    %v84 = vmul.f32 %v55, %v83
    %v85 = vmul.f32 %v58, %v83
    %v86 = vmul.f32 %v61, %v83
    %v87 = vmul.f32 %v64, %v83
    %v88 = vmul.f32 %v67, %v83
    %v89 = vmul.f32 %v70, %v83
    %v90 = vmul.f32 %v73, %v83
    %v91 = vmul.f32 %v76, %v83
    %v92 = vld [vmem:[%s1] sm:$0xff]
    %v93 = vld [vmem:[%s1 + $0x8] sm:$0xff]
    %v94 = vld [vmem:[%s1 + $0x10] sm:$0xff]
    %v95 = vld [vmem:[%s1 + $0x18] sm:$0xff]
    %v96 = vmul.f32 %v92, %v84
    %v97 = vmul.f32 %v93, %v85
    %v98 = vmul.f32 %v94, %v86
    %v99 = vmul.f32 %v95, %v87
    %v100 = vmul.f32 %v92, %v88
    %v101 = vmul.f32 %v93, %v89
    %v102 = vmul.f32 %v94, %v90
    %v103 = vmul.f32 %v95, %v91
    %vm104 = vcmask 15360
    %v105 = vsel %vm104, %v96, 0.0
    %v106 = vsel %vm104, %v97, 0.0
    %v107 = vadd.f32 %v105, %v106
    %v108 = vsel %vm104, %v98, 0.0
    %v109 = vadd.f32 %v107, %v108
    %v110 = vsel %vm104, %v99, 0.0
    %v111 = vadd.f32 %v109, %v110
    %v112 = vrot.slane %v111, 4
    %v113 = vadd.f32 %v111, %v112
    %v114 = vrot.slane %v113, 2
    %v115 = vadd.f32 %v113, %v114
    %v116 = vrot.slane %v115, 1
    %v117 = vadd.f32 %v115, %v116
    %v118 = vsel %vm104, %v100, 0.0
    %v119 = vsel %vm104, %v101, 0.0
    %v120 = vadd.f32 %v118, %v119
    %v121 = vsel %vm104, %v102, 0.0
    %v122 = vadd.f32 %v120, %v121
    %v123 = vsel %vm104, %v103, 0.0
    %v124 = vadd.f32 %v122, %v123
    %v125 = vrot.slane %v124, 4
    %v126 = vadd.f32 %v124, %v125
    %v127 = vrot.slane %v126, 2
    %v128 = vadd.f32 %v126, %v127
    %v129 = vrot.slane %v128, 1
    %v130 = vadd.f32 %v128, %v129
    %v131 = vld [vmem:[%s2] sm:$0x1]
    %v133 = vperm.slane %v131, 0
    %v135 = vadd.f32 %v117, %v133
    %v136 = vadd.f32 %v130, %v133
    %v137 = vmax.f32 %v135, 0.0
    %v138 = vmax.f32 %v136, 0.0
    %v139 = vld [vmem:[%s3] sm:$0xff]
    %v140 = vld [vmem:[%s3 + $0x8] sm:$0xff]
    %v141 = vld [vmem:[%s3 + $0x10] sm:$0xff]
    %v142 = vld [vmem:[%s3 + $0x18] sm:$0xff]
    %v143 = vperm.slane %v137, 0
    %v144 = vperm.slane %v138, 0
    %v145 = vmul.f32 %v139, %v143
    %v146 = vmul.f32 %v140, %v143
    %v147 = vmul.f32 %v141, %v143
    %v148 = vmul.f32 %v142, %v143
    %v149 = vmul.f32 %v139, %v144
    %v150 = vmul.f32 %v140, %v144
    %v151 = vmul.f32 %v141, %v144
    %v152 = vmul.f32 %v142, %v144
    %v153 = vsel %vm104, %v145, 0.0
    %154 = vadd.xlane.f32.xlu0 %v153
    %v155 = vpop.xlane.xlu0 %154
    %v156 = vsel %vm104, %v146, 0.0
    %157 = vadd.xlane.f32.xlu0 %v156
    %v158 = vpop.xlane.xlu0 %157
    %v159 = vsel %vm104, %v147, 0.0
    %160 = vadd.xlane.f32.xlu0 %v159
    %v161 = vpop.xlane.xlu0 %160
    %v162 = vsel %vm104, %v148, 0.0
    %163 = vadd.xlane.f32.xlu0 %v162
    %v164 = vpop.xlane.xlu0 %163
    %v165 = vsel %vm104, %v149, 0.0
    %166 = vadd.xlane.f32.xlu0 %v165
    %v167 = vpop.xlane.xlu0 %166
    %v168 = vsel %vm104, %v150, 0.0
    %169 = vadd.xlane.f32.xlu0 %v168
    %v170 = vpop.xlane.xlu0 %169
    %v171 = vsel %vm104, %v151, 0.0
    %172 = vadd.xlane.f32.xlu0 %v171
    %v173 = vpop.xlane.xlu0 %172
    %v174 = vsel %vm104, %v152, 0.0
    %175 = vadd.xlane.f32.xlu0 %v174
    %v176 = vpop.xlane.xlu0 %175
    %v177 = vld [vmem:[%s4] sm:$0xff]
    %v178 = vld [vmem:[%s4 + $0x8] sm:$0xff]
    %v179 = vld [vmem:[%s4 + $0x10] sm:$0xff]
    %v180 = vld [vmem:[%s4 + $0x18] sm:$0xff]
    %v181 = vadd.f32 %v155, %v177
    %v182 = vadd.f32 %v158, %v178
    %v183 = vadd.f32 %v161, %v179
    %v184 = vadd.f32 %v164, %v180
    %v185 = vadd.f32 %v167, %v177
    %v186 = vadd.f32 %v170, %v178
    %v187 = vadd.f32 %v173, %v179
    %v188 = vadd.f32 %v176, %v180
    %v189 = vxor.u32 %v181, 2147483648
    %v190 = vxor.u32 %v182, 2147483648
    %v191 = vxor.u32 %v183, 2147483648
    %v192 = vxor.u32 %v184, 2147483648
    %v193 = vxor.u32 %v185, 2147483648
    %v194 = vxor.u32 %v186, 2147483648
    %v195 = vxor.u32 %v187, 2147483648
    %v196 = vxor.u32 %v188, 2147483648
    %v197 = vmul.f32 %v189, 1.442695
    %v198 = vpow.pop %v197
    %v199 = vmul.f32 %v190, 1.442695
    %v200 = vpow.pop %v199
    %v201 = vmul.f32 %v191, 1.442695
    %v202 = vpow.pop %v201
    %v203 = vmul.f32 %v192, 1.442695
    %v204 = vpow.pop %v203
    %v205 = vmul.f32 %v193, 1.442695
    %v206 = vpow.pop %v205
    %v207 = vmul.f32 %v194, 1.442695
    %v208 = vpow.pop %v207
    %v209 = vmul.f32 %v195, 1.442695
    %v210 = vpow.pop %v209
    %v211 = vmul.f32 %v196, 1.442695
    %v212 = vpow.pop %v211
    %v213 = vadd.f32 %v198, 1.0
    %v214 = vadd.f32 %v200, 1.0
    %v215 = vadd.f32 %v202, 1.0
    %v216 = vadd.f32 %v204, 1.0
    %v217 = vadd.f32 %v206, 1.0
    %v218 = vadd.f32 %v208, 1.0
    %v219 = vadd.f32 %v210, 1.0
    %v220 = vadd.f32 %v212, 1.0
    %v221 = vrcp.pop %v213
    %v222 = vmul.f32 %v213, %v221
    %v223 = vsub.f32 1.0, %v222
    %v224 = vmul.f32 %v221, %v223
    %v225 = vadd.f32 %v221, %v224
    %vm226 = vweird.f32 %v213
    %vm227 = vweird.f32 %v221
    %vm228 = vmor %vm226, %vm227
    %v229 = vsel %vm228, %v221, %v225
    %v230 = vand.u32 2147483647, %v213
    %vm231 = vcmp.eq.f32.partialorder %v230, 8.507059e+37
    %v232 = vand.u32 %v213, 2147483648
    %v233 = vor.u32 1.1754944e-38, %v232
    %v234 = vsel %vm231, %v233, %v229
    %v235 = vmul.f32 1.0, %v234
    %v236 = vrcp.pop %v214
    %v237 = vmul.f32 %v214, %v236
    %v238 = vsub.f32 1.0, %v237
    %v239 = vmul.f32 %v236, %v238
    %v240 = vadd.f32 %v236, %v239
    %vm241 = vweird.f32 %v214
    %vm242 = vweird.f32 %v236
    %vm243 = vmor %vm241, %vm242
    %v244 = vsel %vm243, %v236, %v240
    %v245 = vand.u32 2147483647, %v214
    %vm246 = vcmp.eq.f32.partialorder %v245, 8.507059e+37
    %v247 = vand.u32 %v214, 2147483648
    %v248 = vor.u32 1.1754944e-38, %v247
    %v249 = vsel %vm246, %v248, %v244
    %v250 = vmul.f32 1.0, %v249
    %v251 = vrcp.pop %v215
    %v252 = vmul.f32 %v215, %v251
    %v253 = vsub.f32 1.0, %v252
    %v254 = vmul.f32 %v251, %v253
    %v255 = vadd.f32 %v251, %v254
    %vm256 = vweird.f32 %v215
    %vm257 = vweird.f32 %v251
    %vm258 = vmor %vm256, %vm257
    %v259 = vsel %vm258, %v251, %v255
    %v260 = vand.u32 2147483647, %v215
    %vm261 = vcmp.eq.f32.partialorder %v260, 8.507059e+37
    %v262 = vand.u32 %v215, 2147483648
    %v263 = vor.u32 1.1754944e-38, %v262
    %v264 = vsel %vm261, %v263, %v259
    %v265 = vmul.f32 1.0, %v264
    %v266 = vrcp.pop %v216
    %v267 = vmul.f32 %v216, %v266
    %v268 = vsub.f32 1.0, %v267
    %v269 = vmul.f32 %v266, %v268
    %v270 = vadd.f32 %v266, %v269
    %vm271 = vweird.f32 %v216
    %vm272 = vweird.f32 %v266
    %vm273 = vmor %vm271, %vm272
    %v274 = vsel %vm273, %v266, %v270
    %v275 = vand.u32 2147483647, %v216
    %vm276 = vcmp.eq.f32.partialorder %v275, 8.507059e+37
    %v277 = vand.u32 %v216, 2147483648
    %v278 = vor.u32 1.1754944e-38, %v277
    %v279 = vsel %vm276, %v278, %v274
    %v280 = vmul.f32 1.0, %v279
    %v281 = vrcp.pop %v217
    %v282 = vmul.f32 %v217, %v281
    %v283 = vsub.f32 1.0, %v282
    %v284 = vmul.f32 %v281, %v283
    %v285 = vadd.f32 %v281, %v284
    %vm286 = vweird.f32 %v217
    %vm287 = vweird.f32 %v281
    %vm288 = vmor %vm286, %vm287
    %v289 = vsel %vm288, %v281, %v285
    %v290 = vand.u32 2147483647, %v217
    %vm291 = vcmp.eq.f32.partialorder %v290, 8.507059e+37
    %v292 = vand.u32 %v217, 2147483648
    %v293 = vor.u32 1.1754944e-38, %v292
    %v294 = vsel %vm291, %v293, %v289
    %v295 = vmul.f32 1.0, %v294
    %v296 = vrcp.pop %v218
    %v297 = vmul.f32 %v218, %v296
    %v298 = vsub.f32 1.0, %v297
    %v299 = vmul.f32 %v296, %v298
    %v300 = vadd.f32 %v296, %v299
    %vm301 = vweird.f32 %v218
    %vm302 = vweird.f32 %v296
    %vm303 = vmor %vm301, %vm302
    %v304 = vsel %vm303, %v296, %v300
    %v305 = vand.u32 2147483647, %v218
    %vm306 = vcmp.eq.f32.partialorder %v305, 8.507059e+37
    %v307 = vand.u32 %v218, 2147483648
    %v308 = vor.u32 1.1754944e-38, %v307
    %v309 = vsel %vm306, %v308, %v304
    %v310 = vmul.f32 1.0, %v309
    %v311 = vrcp.pop %v219
    %v312 = vmul.f32 %v219, %v311
    %v313 = vsub.f32 1.0, %v312
    %v314 = vmul.f32 %v311, %v313
    %v315 = vadd.f32 %v311, %v314
    %vm316 = vweird.f32 %v219
    %vm317 = vweird.f32 %v311
    %vm318 = vmor %vm316, %vm317
    %v319 = vsel %vm318, %v311, %v315
    %v320 = vand.u32 2147483647, %v219
    %vm321 = vcmp.eq.f32.partialorder %v320, 8.507059e+37
    %v322 = vand.u32 %v219, 2147483648
    %v323 = vor.u32 1.1754944e-38, %v322
    %v324 = vsel %vm321, %v323, %v319
    %v325 = vmul.f32 1.0, %v324
    %v326 = vrcp.pop %v220
    %v327 = vmul.f32 %v220, %v326
    %v328 = vsub.f32 1.0, %v327
    %v329 = vmul.f32 %v326, %v328
    %v330 = vadd.f32 %v326, %v329
    %vm331 = vweird.f32 %v220
    %vm332 = vweird.f32 %v326
    %vm333 = vmor %vm331, %vm332
    %v334 = vsel %vm333, %v326, %v330
    %v335 = vand.u32 2147483647, %v220
    %vm336 = vcmp.eq.f32.partialorder %v335, 8.507059e+37
    %v337 = vand.u32 %v220, 2147483648
    %v338 = vor.u32 1.1754944e-38, %v337
    %v339 = vsel %vm336, %v338, %v334
    %v340 = vmul.f32 1.0, %v339
    %342 = vset.pattern.permute.xlu0 0
    %343 = vperm.xlu0 %342, %v235
    %v344 = vpop.permute.xlu0 %343
    %347 = vset.pattern.permute.xlu0 0
    %348 = vperm.xlu0 %347, %v250
    %v349 = vpop.permute.xlu0 %348
    %352 = vset.pattern.permute.xlu0 0
    %353 = vperm.xlu0 %352, %v265
    %v354 = vpop.permute.xlu0 %353
    %357 = vset.pattern.permute.xlu0 0
    %358 = vperm.xlu0 %357, %v280
    %v359 = vpop.permute.xlu0 %358
    %362 = vset.pattern.permute.xlu0 0
    %363 = vperm.xlu0 %362, %v295
    %v364 = vpop.permute.xlu0 %363
    %367 = vset.pattern.permute.xlu0 0
    %368 = vperm.xlu0 %367, %v310
    %v369 = vpop.permute.xlu0 %368
    %372 = vset.pattern.permute.xlu0 0
    %373 = vperm.xlu0 %372, %v325
    %v374 = vpop.permute.xlu0 %373
    %377 = vset.pattern.permute.xlu0 0
    %378 = vperm.xlu0 %377, %v340
    %v379 = vpop.permute.xlu0 %378
    %v381 = vmul.f32 %v37, %v344
    %v382 = vmul.f32 %v38, %v344
    %v383 = vmul.f32 %v39, %v349
    %v384 = vmul.f32 %v40, %v349
    %v385 = vmul.f32 %v41, %v354
    %v386 = vmul.f32 %v42, %v354
    %v387 = vmul.f32 %v43, %v359
    %v388 = vmul.f32 %v44, %v359
    %v389 = vmul.f32 %v45, %v364
    %v390 = vmul.f32 %v46, %v364
    %v391 = vmul.f32 %v47, %v369
    %v392 = vmul.f32 %v48, %v369
    %v393 = vmul.f32 %v49, %v374
    %v394 = vmul.f32 %v50, %v374
    %v395 = vmul.f32 %v51, %v379
    %v396 = vmul.f32 %v52, %v379
    %397 = vst [vmem:[#allocation5] sm:$0xff] %v381
    %398 = vst [vmem:[#allocation5 + $0x8] sm:$0xff] %v382
    %399 = vst [vmem:[#allocation5 + $0x10] sm:$0xff] %v383
    %400 = vst [vmem:[#allocation5 + $0x18] sm:$0xff] %v384
    %401 = vst [vmem:[#allocation5 + $0x20] sm:$0xff] %v385
    %402 = vst [vmem:[#allocation5 + $0x28] sm:$0xff] %v386
    %403 = vst [vmem:[#allocation5 + $0x30] sm:$0xff] %v387
    %404 = vst [vmem:[#allocation5 + $0x38] sm:$0xff] %v388
    %405 = vst [vmem:[#allocation5 + $0x40] sm:$0xff] %v389
    %406 = vst [vmem:[#allocation5 + $0x48] sm:$0xff] %v390
    %407 = vst [vmem:[#allocation5 + $0x50] sm:$0xff] %v391
    %408 = vst [vmem:[#allocation5 + $0x58] sm:$0xff] %v392
    %409 = vst [vmem:[#allocation5 + $0x60] sm:$0xff] %v393
    %410 = vst [vmem:[#allocation5 + $0x68] sm:$0xff] %v394
    %411 = vst [vmem:[#allocation5 + $0x70] sm:$0xff] %v395
    %412 = vst [vmem:[#allocation5 + $0x78] sm:$0xff] %v396
    // Predicated region
    $region26: #{tpu_custom_call.1} parent=1 // pred_check
      _
    $region27: #{tpu_custom_call.1} parent=1 // pred_check_branch
      %414 = sbr.rel (0) target = $region29
    $region28: #{tpu_custom_call.1} parent=1 // pred_region
      %416 = vsyncadd [#allocation4], 0
      %s417 = sshll.u32 [#allocation5], 4
      %s418 = int_to_ptr.vmem [resolvable:$true] %s417
      %s419 = sshll.u32 %s5, 4
      %s420 = int_to_ptr.hbm [resolvable:$true] %s419
      %425 = dma.vmem_to_hbm [thread:$0]  %s418, 2048, %s420, [#allocation4], 256, 256, 16
    $region29: #{tpu_custom_call.1} parent=1 // pred_fallthru
      _
    // Predicated region
    $region30: #{tpu_custom_call.1} parent=1 // pred_check
      _
    $region31: #{tpu_custom_call.1} parent=1 // pred_check_branch
      %427 = sbr.rel (0) target = $region33
    $region32: #{tpu_custom_call.1} parent=1 // pred_region
      %429 = dma.done [#allocation4], 2048
    $region33: #{tpu_custom_call.1} parent=1 // pred_fallthru
      _
    %430 = vsyncpa [#allocation3], 1
    %431 = vsyncpa [#allocation4], 1

</llo_original>
